<compile_context>
chip_gen: v6e
topology: v6e:2x2x1
jax: 0.10.0
libtpu: 0.0.40
codegen_flags: <defaults>
</compile_context>

<pallas_src>
import functools

import jax
import jax.numpy as jnp
from jax.experimental import pallas as pl
from jax.experimental.pallas import tpu as pltpu


def _mean_lastdim_kernel(x_ref, o_ref, acc_ref, *, e_total, inv_e):
    """One (tm, te) block: accumulate f32 row sums, emit mean on last E chunk."""
    e_idx = pl.program_id(1)

    @pl.when(e_idx == 0)
    def _init():
        acc_ref[...] = jnp.zeros_like(acc_ref)

    x = x_ref[...]
    tm_b, te_b = x.shape

    # Mask the tail of a partial last E chunk (only emitted at trace time when
    # E is not a multiple of the chunk size).
    if e_total % te_b != 0:
        col = jax.lax.broadcasted_iota(jnp.int32, (tm_b, te_b), 1) + e_idx * te_b
        x = jnp.where(col < e_total, x, jnp.zeros_like(x))

    # Lane-parallel partial sums on the VALU (128-wide f32 accumulator, no
    # full-block f32 temp for sub-f32 inputs), then one cross-lane reduce.
    if te_b % 128 == 0 and te_b >= 256:
        acc128 = x[:, 0:128].astype(jnp.float32)
        for c in range(1, te_b // 128):
            acc128 = acc128 + x[:, c * 128:(c + 1) * 128].astype(jnp.float32)
        s = jnp.sum(acc128, axis=-1, keepdims=True)
    else:
        s = jnp.sum(x.astype(jnp.float32), axis=-1, keepdims=True)

    acc_ref[...] = acc_ref[...] + s

    @pl.when(e_idx == pl.num_programs(1) - 1)
    def _finalize():
        o_ref[...] = (acc_ref[...] * jnp.float32(inv_e)).astype(o_ref.dtype)


def _round_up(x, m):
    return ((x + m - 1) // m) * m


def _vmem_capacity_bytes():
    try:
        return int(pltpu.get_tpu_info().vmem_capacity_bytes)
    except Exception:
        return 64 << 20  # conservative (v7x-sized) fallback


def _choose_tiles(m, e, itemsize, vmem_capacity, tm=None, te=None):
    """Pick (tm, te) tile sizes satisfying the (8, 128) BlockSpec constraint."""
    # Per-block input byte target: big blocks amortize the ~0.35 us/step cost.
    # ~8 MiB on 64-MiB-VMEM parts (v7x), ~16 MiB where VMEM is 128 MiB.
    input_target = (8 << 20) if vmem_capacity <= (64 << 20) else (16 << 20)

    # ---- E chunk -------------------------------------------------------
    if te is None:
        # Whole row unless even an 8-row block would blow the target budget.
        if 8 * e * itemsize <= input_target:
            te = e
        else:
            te = (input_target // (8 * itemsize) // 128) * 128
    # Legalize: last block dim must equal E or be a multiple of 128.
    if te >= e:
        te = e
    else:
        te = max(128, (te // 128) * 128)
        te = min(te, e)

    # ---- M (row) tile ---------------------------------------------------
    if tm is None:
        tm = max(8, input_target // max(1, te * itemsize))
        # Guarantee >=2 row blocks so both v7x TensorCores get work.
        if m >= 16:
            tm = min(tm, _round_up(pl.cdiv(m, 2), 8))
        # Prefer >=8 blocks when each block still carries >=2 MiB of input.
        tm8 = _round_up(pl.cdiv(m, 8), 8)
        if tm8 * te * itemsize >= (2 << 20):
            tm = min(tm, tm8)
    # Legalize: second-minor block dim must be a multiple of 8 or the full M.
    if tm >= m:
        tm = m
    else:
        tm = max(8, (tm // 8) * 8)
    return int(tm), int(te)


def output_reducer(x, *, tm=None, te=None, buffer_count=None, core_parallel=False):
    """Pallas implementation of OutputReducer.forward: mean over dim=2.

    Args:
      x: (seq_len, batch_size, embedding_dim) array.
      tm: optional row-tile override (rows of the flattened (S*B, E) view).
      te: optional embedding-chunk override (columns per grid step).
      buffer_count: optional input pipelining depth; Pallas double-buffers by
        default — try 3 only if a profile shows exposed input DMA.
      core_parallel: use pltpu.CORE_PARALLEL on the row axis (profile-gated
        v7x knob; plain "parallel" is the portable default).

    Returns:
      (seq_len, batch_size) array with the same dtype as x.
    """
    S, B, E = x.shape
    M = S * B
    in_itemsize = jnp.dtype(x.dtype).itemsize
    out_itemsize = in_itemsize
    vmem_capacity = _vmem_capacity_bytes()

    tm, te = _choose_tiles(M, E, in_itemsize, vmem_capacity, tm=tm, te=te)

    x2 = x.reshape(M, E)                      # contiguous reshape: free.
    grid = (pl.cdiv(M, tm), pl.cdiv(E, te))   # partial blocks masked/trimmed.

    n_buf = buffer_count if buffer_count is not None else 2
    # Resident VMEM: N-buffered input + double-buffered output + f32 row
    # accumulator + f32 128-lane partial + headroom.
    vmem_bytes = (n_buf * tm * te * in_itemsize
                  + 2 * tm * out_itemsize
                  + tm * 4
                  + tm * 128 * 4
                  + (4 << 20))
    vmem_bytes = int(min(vmem_bytes, vmem_capacity))

    in_spec_kwargs = {}
    if buffer_count is not None:
        in_spec_kwargs["pipeline_mode"] = pl.Buffered(buffer_count)
    in_spec = pl.BlockSpec((tm, te), lambda i, j: (i, j), **in_spec_kwargs)

    if core_parallel:
        dim_sem = (pltpu.CORE_PARALLEL, pltpu.ARBITRARY)
    else:
        dim_sem = ("parallel", "arbitrary")

    kernel = functools.partial(_mean_lastdim_kernel, e_total=E, inv_e=1.0 / E)

    out = pl.pallas_call(
        kernel,
        out_shape=jax.ShapeDtypeStruct((M, 1), x.dtype),
        grid_spec=pltpu.PrefetchScalarGridSpec(
            num_scalar_prefetch=0,
            grid=grid,
            in_specs=[in_spec],
            out_specs=pl.BlockSpec((tm, 1), lambda i, j: (i, 0)),
            scratch_shapes=[pltpu.VMEM((tm, 1), jnp.float32)],
        ),
        compiler_params=pltpu.CompilerParams(
            dimension_semantics=dim_sem,
            vmem_limit_bytes=vmem_bytes,
        ),
        cost_estimate=pl.CostEstimate(
            flops=int(M) * int(E),
            transcendentals=0,
            bytes_accessed=int(M) * int(E) * in_itemsize + int(M) * out_itemsize,
        ),
    )(x2)

    return out.reshape(S, B)


if __name__ == "__main__":
    key = jax.random.PRNGKey(0)
    k0, k1, k2, k3 = jax.random.split(key, 4)

    # 1) Small shape consistent with the module (seq=8, batch=2, emb=32).
    x1 = jax.random.normal(k0, (8, 2, 32), dtype=jnp.float32)
    y1 = jax.block_until_ready(output_reducer(x1))
    assert y1.shape == (8, 2)
    assert jnp.allclose(y1, jnp.mean(x1, axis=2), atol=1e-5, rtol=1e-5)

    # 2) Multi-block pipelined path (16 parallel row blocks, two-stage reduce).
    x2 = jax.random.normal(k1, (512, 4, 256), dtype=jnp.float32)
    y2 = jax.block_until_ready(output_reducer(x2, tm=128))
    assert y2.shape == (512, 4)
    assert jnp.allclose(y2, jnp.mean(x2, axis=2), atol=1e-5, rtol=1e-5)

    # 3) Chunked-E path: accumulator across 3 embedding chunks.
    x3 = jax.random.normal(k2, (64, 2, 384), dtype=jnp.float32)
    y3 = jax.block_until_ready(output_reducer(x3, te=128))
    assert y3.shape == (64, 2)
    assert jnp.allclose(y3, jnp.mean(x3, axis=2), atol=1e-5, rtol=1e-5)

    # 4) bf16 input + partial (masked) last E chunk.
    x4 = jax.random.normal(k3, (16, 3, 200), dtype=jnp.bfloat16)
    y4 = jax.block_until_ready(output_reducer(x4, te=128))
    assert y4.shape == (16, 3)
    ref4 = jnp.mean(x4.astype(jnp.float32), axis=2)
    assert jnp.allclose(y4.astype(jnp.float32), ref4, atol=2e-2, rtol=2e-2)

    print("KERNEL_OK")
</pallas_src>

<mosaic_0001>
module attributes {stable_mosaic.version = 11 : i64} {
  func.func @_mean_lastdim_kernel(%arg0: i32, %arg1: i32, %arg2: memref<8x32xf32, #tpu.memory_space<vmem>>, %arg3: memref<8x1xf32, #tpu.memory_space<vmem>>, %arg4: memref<8x1xf32, #tpu.memory_space<vmem>>) attributes {dimension_semantics = [#tpu.dimension_semantics<parallel>, #tpu.dimension_semantics<arbitrary>], iteration_bounds = array<i64: 2, 1>, scalar_prefetch = 0 : i64, scratch_operands = 1 : i64, tpu.core_type = #tpu.core_type<tc>, window_params = [{transform_indices = @transform_0, window_bounds = array<i64: 8, 32>}, {transform_indices = @transform_1, window_bounds = array<i64: 8, 1>}]} {
    %c0_i32 = arith.constant 0 : i32
    %0 = arith.cmpi eq, %arg1, %c0_i32 : i32
    %1 = arith.extui %0 : i1 to i32
    %c0_i32_0 = arith.constant 0 : i32
    %2 = arith.cmpi ne, %1, %c0_i32_0 : i32
    scf.if %2 {
      %cst_8 = arith.constant 0.000000e+00 : f32
      %12 = vector.broadcast %cst_8 : f32 to vector<8x1xf32>
      %c0_9 = arith.constant 0 : index
      %c0_10 = arith.constant 0 : index
      %13 = vector.load %arg4[%c0_9, %c0_10] : memref<8x1xf32, #tpu.memory_space<vmem>>, vector<8x1xf32>
      tpu.vector_store %arg4[%c0_9, %c0_10], %12 {strides = array<i32>} : memref<8x1xf32, #tpu.memory_space<vmem>>, vector<8x1xf32>,
    } else {
    }
    %c0 = arith.constant 0 : index
    %c0_1 = arith.constant 0 : index
    %3 = vector.load %arg2[%c0, %c0_1] : memref<8x32xf32, #tpu.memory_space<vmem>>, vector<8x32xf32>
    %cst = arith.constant dense<0.000000e+00> : vector<8xf32>
    %4 = vector.multi_reduction <add>, %3, %cst [1] : vector<8x32xf32> to vector<8xf32>
    %5 = vector.shape_cast %4 : vector<8xf32> to vector<8x1xf32>
    %c0_2 = arith.constant 0 : index
    %c0_3 = arith.constant 0 : index
    %6 = vector.load %arg4[%c0_2, %c0_3] : memref<8x1xf32, #tpu.memory_space<vmem>>, vector<8x1xf32>
    %7 = arith.addf %6, %5 : vector<8x1xf32>
    %c0_4 = arith.constant 0 : index
    %c0_5 = arith.constant 0 : index
    %8 = vector.load %arg4[%c0_4, %c0_5] : memref<8x1xf32, #tpu.memory_space<vmem>>, vector<8x1xf32>
    tpu.vector_store %arg4[%c0_4, %c0_5], %7 {strides = array<i32>} : memref<8x1xf32, #tpu.memory_space<vmem>>, vector<8x1xf32>,
    %c0_i32_6 = arith.constant 0 : i32
    %9 = arith.cmpi eq, %arg1, %c0_i32_6 : i32
    %10 = arith.extui %9 : i1 to i32
    %c0_i32_7 = arith.constant 0 : i32
    %11 = arith.cmpi ne, %10, %c0_i32_7 : i32
    scf.if %11 {
      %c0_8 = arith.constant 0 : index
      %c0_9 = arith.constant 0 : index
      %12 = vector.load %arg4[%c0_8, %c0_9] : memref<8x1xf32, #tpu.memory_space<vmem>>, vector<8x1xf32>
      %cst_10 = arith.constant 3.125000e-02 : f32
      %13 = vector.broadcast %cst_10 : f32 to vector<8x1xf32>
      %14 = arith.mulf %12, %13 : vector<8x1xf32>
      %c0_11 = arith.constant 0 : index
      %c0_12 = arith.constant 0 : index
      %15 = vector.load %arg3[%c0_11, %c0_12] : memref<8x1xf32, #tpu.memory_space<vmem>>, vector<8x1xf32>
      tpu.vector_store %arg3[%c0_11, %c0_12], %14 {strides = array<i32>} : memref<8x1xf32, #tpu.memory_space<vmem>>, vector<8x1xf32>,
    } else {
    }
    return
  }
  func.func @transform_0(%arg0: i32, %arg1: i32) -> (i32, i32) {
    %c0_i32 = arith.constant 0 : i32
    return %arg0, %arg1 : i32, i32
  }
  func.func @transform_1(%arg0: i32, %arg1: i32) -> (i32, i32) {
    %c0_i32 = arith.constant 0 : i32
    %c0_i32_0 = arith.constant 0 : i32
    return %arg0, %c0_i32 : i32, i32
  }
}

</mosaic_0001>

<llo_original>
// kernel: tpu_custom_call.1
$region0: #{tpu_custom_call.1}
  #allocation0 [shape = 'u32[]', space=smem, size = 0x4, offset = 0x4, fixed_abs, tag = 'smem constant byte address 0x4 - core index']
  #allocation1 [shape = 'u32[144,128]{1,0:T(1,128)}', space=vmem, size = 0x12000, scoped, tag = 'internal scratch']
  #allocation2 [shape = 'f32[8,1]{1,0:T(8,128)}', space=vmem, size = 0x1000, scoped, tag = 'scratch operand']
  %s0 = inlined_call_operand.hbm [shape: f32[16,32], index: 0, kind: input, shape index: {}]
  %s1 = inlined_call_operand.vmem [shape: f32[16,1], index: 1, kind: output, shape index: {}]
  %s2 = sld [smem:[#allocation0]]
  $region49: #{tpu_custom_call.1} parent=0
    _
  %s4 = ssub.s32 1, %s2
  %s5 = scalar_select 0, %s4, %s2
  $region1: #{tpu_custom_call.1} parent=0
    #allocation3 [shape = 'u8[8192]{0}', space=vmem, size = 0x2000, scoped, tag = 'input window, operand 0']
    #allocation4 [shape = 's32[2]{0}', space=sflag, size = 0x8, scoped, tag = 'scoped memory for tpu_custom_call.1']
    %6 = vsyncpa [#allocation4], 0
    %s7 = scalar_lea.sflag [#allocation4], 1
    %8 = vsyncpa %s7, 0
    loop: start=0, step=1, limit=4
    $region2: #{tpu_custom_call.1} parent=1 // loop_pre_header
      _
    $region3: #{tpu_custom_call.1} parent=1 // loop_header
      %s10 = sphi 0, %s14
      %p11 = scmp.ge.s32.totalorder %s10, 4
      %s17 = sphi 0, %s29
      %s18 = sphi 0, %s25
      %s19 = sphi 0, %s17
      %s20 = sphi 0, %s18
      %s21 = sphi 0, %s19
      %s22 = sphi 0, %s20
      %s34 = sphi 0, %s36
      %s37 = sphi 0, %s34
      %s38 = sphi 0, %s37
      %s54 = sphi 0, %s38
      %s60 = sphi 0, %s62
      %s63 = sphi 0, %s60
      %s64 = sphi 0, %s63
      %s80 = sphi 0, %s64
    $region4: #{tpu_custom_call.1} parent=1 // loop_header_branch
      %13 = sbr.rel (%p11) target = $region8
    $region5: #{tpu_custom_call.1} parent=1 // loop_body
      %s15 = ssub.s32 %s10, 1
      %s16 = ssub.s32 %s10, 2
      %s23 = sadd.s32 1, %s18
      %p24 = scmp.ge.s32.totalorder %s23, 1
      %s25 = scalar_select %p24, 0, %s23
      %s26 = sadd.s32 1, %s17
      %s27 = scalar_select %p24, %s26, %s17
      %p28 = scmp.ge.s32.totalorder %s27, 2
      %s29 = scalar_select %p28, 0, %s27
      %s30 = ssub.s32 %s17, %s29
      %s31 = ssub.s32 %s18, %s25
      %s32 = sor.u32 %s30, %s31
      %p33 = scmp.eq.s32.totalorder %s32, 0
      %s35 = sadd.s32 %s34, 1
      %s36 = scalar_select %p33, %s34, %s35
      %p39 = pneg %p33
      %p40 = scmp.eq.s32.totalorder %s10, 1
      %p41 = por %p39, %p40
      %p42 = scmp.ne.s32.totalorder %s34, %s37
      %p43 = scmp.eq.s32.totalorder %s10, 0
      %p44 = por %p42, %p43
      %p45 = scmp.ne.s32.totalorder %s34, %s37
      %p46 = scmp.eq.s32.totalorder %s15, 1
      %p47 = por %p45, %p46
      %p48 = scmp.ne.s32.totalorder %s37, %s38
      %p49 = scmp.eq.s32.totalorder %s15, 0
      %p50 = por %p48, %p49
      %p51 = scmp.ne.s32.totalorder %s37, %s38
      %p52 = scmp.eq.s32.totalorder %s16, 1
      %p53 = por %p51, %p52
      %p55 = scmp.ne.s32.totalorder %s38, %s54
      %p56 = scmp.eq.s32.totalorder %s16, 0
      %p57 = por %p55, %p56
      %s58 = ssub.s32 %s17, %s29
      %p59 = scmp.eq.s32.totalorder %s58, 0
      %s61 = sadd.s32 %s60, 1
      %s62 = scalar_select %p59, %s60, %s61
      %p65 = pneg %p59
      %p66 = scmp.eq.s32.totalorder %s10, 1
      %p67 = por %p65, %p66
      %p68 = scmp.ne.s32.totalorder %s60, %s63
      %p69 = scmp.eq.s32.totalorder %s10, 0
      %p70 = por %p68, %p69
      %p71 = scmp.ne.s32.totalorder %s60, %s63
      %p72 = scmp.eq.s32.totalorder %s15, 1
      %p73 = por %p71, %p72
      %p74 = scmp.ne.s32.totalorder %s63, %s64
      %p75 = scmp.eq.s32.totalorder %s15, 0
      %p76 = por %p74, %p75
      %p77 = scmp.ne.s32.totalorder %s63, %s64
      %p78 = scmp.eq.s32.totalorder %s16, 1
      %p79 = por %p77, %p78
      %p81 = scmp.ne.s32.totalorder %s64, %s80
      %p82 = scmp.eq.s32.totalorder %s16, 0
      %p83 = por %p81, %p82
      %p84 = scmp.le.s32.totalorder 1, %s10
      %p85 = scmp.lt.s32.totalorder %s10, 3
      %p86 = pnand %p84, %p85
      %p87 = pneg %p86
      // Predicated region
      $region9: #{tpu_custom_call.1} parent=5 // pred_check
        _
      $region10: #{tpu_custom_call.1} parent=5 // pred_check_branch
        %89 = sbr.rel (%p86) target = $region12
      $region11: #{tpu_custom_call.1} parent=5 // pred_region
        %s90 = ssub.s32 %s10, 1
      $region12: #{tpu_custom_call.1} parent=5 // pred_fallthru
        _
      %p91 = scmp.lt.s32.totalorder %s10, 2
      // Predicated region
      $region13: #{tpu_custom_call.1} parent=5 // pred_check
        %p92 = pneg %p91
      $region14: #{tpu_custom_call.1} parent=5 // pred_check_branch
        %94 = sbr.rel (%p92) target = $region16
      $region15: #{tpu_custom_call.1} parent=5 // pred_region
        // Predicated region
        $region17: #{tpu_custom_call.1} parent=15 // pred_check
          %p95 = pneg %p44
        $region18: #{tpu_custom_call.1} parent=15 // pred_check_branch
          %97 = sbr.rel (%p95) target = $region20
        $region19: #{tpu_custom_call.1} parent=15 // pred_region
          %s98 = sand.u32 %s34, 1
          %s99 = scalar_lea.sflag [#allocation4], %s98
          %s100 = sand.u32 %s34, 1
          %s101 = smul.addr %s100, 8
          %s102 = scalar_lea.vmem [#allocation3], %s101
          %s104 = ssub.s32 128, 128
          %105 = vsyncadd %s99, %s104
          %s106 = sadd.s32 %s18, %s17
          %s107 = smul.addr %s106, 128
          %s108 = scalar_lea.hbm %s0, %s107
          %s110 = sshll.u32 %s102, 4
          %s111 = int_to_ptr.vmem [resolvable:$true] %s110
          %113 = dma.hbm_to_vmem [thread:$0]  %s108, 128, %s111, %s99
        $region20: #{tpu_custom_call.1} parent=15 // pred_fallthru
          _
      $region16: #{tpu_custom_call.1} parent=5 // pred_fallthru
        _
      %p114 = scmp.le.s32.totalorder 1, %s10
      %p115 = scmp.lt.s32.totalorder %s10, 3
      %p116 = pnand %p114, %p115
      %p117 = pneg %p116
      // Predicated region
      $region21: #{tpu_custom_call.1} parent=5 // pred_check
        _
      $region22: #{tpu_custom_call.1} parent=5 // pred_check_branch
        %119 = sbr.rel (%p116) target = $region24
      $region23: #{tpu_custom_call.1} parent=5 // pred_region
        %s120 = ssub.s32 %s10, 1
        %s121 = sand.u32 %s37, 1
        %s122 = scalar_lea.sflag [#allocation4], %s121
        %s123 = sand.u32 %s37, 1
        %s124 = smul.addr %s123, 8
        %s125 = scalar_lea.vmem [#allocation3], %s124
        // Predicated region
        $region25: #{tpu_custom_call.1} parent=23 // pred_check
          %p126 = pneg %p50
        $region26: #{tpu_custom_call.1} parent=23 // pred_check_branch
          %128 = sbr.rel (%p126) target = $region28
        $region27: #{tpu_custom_call.1} parent=23 // pred_region
          %129 = dma.done %s122, 128
        $region28: #{tpu_custom_call.1} parent=23 // pred_fallthru
          _
        %s130 = sand.u32 %s37, 1
        %s131 = scalar_lea.sflag [#allocation4], %s130
        %s132 = sand.u32 %s37, 1
        %s133 = smul.addr %s132, 8
        %s134 = scalar_lea.vmem [#allocation3], %s133
        %p135 = pneg %p50
        %p136 = pneg %p47
        %p137 = pneg %p76
        %p138 = pneg %p73
        %p139 = scmp.lt.s32.totalorder %s19, 1
        %s140 = scalar_select %p139, %s19, 1
        %s141 = smul.addr %s140, 8
        %s142 = scalar_lea.vmem %s1, %s141
        %p143 = scmp.lt.s32.totalorder %s19, 1
        %s144 = scalar_select %p143, %s19, 1
        %s145 = smul.addr %s144, 8
        %s146 = scalar_lea.vmem %s1, %s145
        %p147 = scmp.eq.s32.totalorder %s20, 0
        // Predicated region
        $region29: #{tpu_custom_call.1} parent=23 // pred_check
          %p148 = pneg %p147
        $region30: #{tpu_custom_call.1} parent=23 // pred_check_branch
          %150 = sbr.rel (%p148) target = $region32
        $region31: #{tpu_custom_call.1} parent=23 // pred_region
          %vm151 = vcmask 7168
          %152 = vst.msk [vmem:[#allocation2] sm:$0xff] %vm151, 0.0
        $region32: #{tpu_custom_call.1} parent=23 // pred_fallthru
          _
        %v153 = vld [vmem:[%s125] sm:$0xff]
        %vm154 = vcmask 261120
        %v155 = vsel %vm154, %v153, 0.0
        %156 = vadd.xlane.f32.xlu0 %v155
        %v157 = vpop.xlane.xlu0 %156
        %v158 = vld [vmem:[#allocation2] sm:$0xff]
        %v159 = vadd.f32 %v158, %v157
        %vm160 = vcmask 7168
        %161 = vst.msk [vmem:[#allocation2] sm:$0xff] %vm160, %v159
        // Predicated region
        $region33: #{tpu_custom_call.1} parent=23 // pred_check
          %p162 = pneg %p147
        $region34: #{tpu_custom_call.1} parent=23 // pred_check_branch
          %164 = sbr.rel (%p162) target = $region36
        $region35: #{tpu_custom_call.1} parent=23 // pred_region
          %v165 = vld [vmem:[#allocation2] sm:$0xff]
          %v166 = vmul.f32 %v165, 0.03125
          %167 = vst.msk [vmem:[%s146] sm:$0xff] %vm160, %v166
        $region36: #{tpu_custom_call.1} parent=23 // pred_fallthru
          _
        %p168 = scmp.lt.s32.totalorder %s19, 1
        %s169 = scalar_select %p168, %s19, 1
        %s170 = smul.addr %s169, 8
        %s171 = scalar_lea.vmem %s1, %s170
        // Predicated region
        $region37: #{tpu_custom_call.1} parent=23 // pred_check
          %p172 = pneg %p73
        $region38: #{tpu_custom_call.1} parent=23 // pred_check_branch
          %174 = sbr.rel (%p172) target = $region40
        $region39: #{tpu_custom_call.1} parent=23 // pred_region
          _
        $region40: #{tpu_custom_call.1} parent=23 // pred_fallthru
          _
      $region24: #{tpu_custom_call.1} parent=5 // pred_fallthru
        _
      %p175 = scmp.le.s32.totalorder 2, %s10
      // Predicated region
      $region41: #{tpu_custom_call.1} parent=5 // pred_check
        %p176 = pneg %p175
      $region42: #{tpu_custom_call.1} parent=5 // pred_check_branch
        %178 = sbr.rel (%p176) target = $region44
      $region43: #{tpu_custom_call.1} parent=5 // pred_region
        %s179 = ssub.s32 %s10, 2
        // Predicated region
        $region45: #{tpu_custom_call.1} parent=43 // pred_check
          %p180 = pneg %p79
        $region46: #{tpu_custom_call.1} parent=43 // pred_check_branch
          %182 = sbr.rel (%p180) target = $region48
        $region47: #{tpu_custom_call.1} parent=43 // pred_region
          %p183 = scmp.lt.s32.totalorder %s21, 1
          %s184 = scalar_select %p183, %s21, 1
          %s185 = smul.addr %s184, 8
          %s186 = scalar_lea.vmem %s1, %s185
        $region48: #{tpu_custom_call.1} parent=43 // pred_fallthru
          _
      $region44: #{tpu_custom_call.1} parent=5 // pred_fallthru
        _
    $region6: #{tpu_custom_call.1} parent=1 // loop_footer
      %s14 = sadd.s32 1, %s10
    $region7: #{tpu_custom_call.1} parent=1 // loop_footer_branch
      %9 = sbr.rel target = $region3
    $region8: #{tpu_custom_call.1} parent=1 // loop_exit
      _
    %187 = vsyncpa [#allocation4], 1
    %s188 = scalar_lea.sflag [#allocation4], 1
    %189 = vsyncpa %s188, 1

</llo_original>
